<compile_context>
chip_gen: v7x
topology: tpu7x:2x2x1
jax: 0.10.0
libtpu: 0.0.40
codegen_flags: <defaults>
</compile_context>

<pallas_src>
import functools

import jax
import jax.numpy as jnp
from jax import lax
from jax.experimental import pallas as pl
from jax.experimental.pallas import tpu as pltpu

_LANE = 128
_SUBLANE = 8
_VMEM_STREAM_BUDGET = 20 * 1024 * 1024   # double-buffered A + out blocks
_VMEM_LIMIT_BYTES = 32 * 1024 * 1024     # raises v5e default, <= v6e/v7x scoped


def convblock_kernel(a_ref, w_ref, sb_ref, o_ref):
    """One lane-dense output row-strip per grid step.

    a_ref  : (r_tile, K*Cin*Wp)   row-triplet activations (Wp = W + 2*pad)
    w_ref  : (K*Cin*Wp, W*Cout)   block-Toeplitz-along-W conv weight (resident)
    sb_ref : (2, W*Cout)          row 0 = BN scale, row 1 = BN bias (pre-tiled)
    o_ref  : (r_tile, W*Cout)     lane-dense output strip
    """
    # Single MXU dot, dense 216-deep contraction, f32 accumulation.
    acc = jnp.dot(a_ref[...], w_ref[...], preferred_element_type=jnp.float32)
    # Folded-BatchNorm affine + LeakyReLU(0.01) on full 128-lane slabs (VPU).
    y = acc * sb_ref[0:1, :] + sb_ref[1:2, :]
    y = jnp.where(y > 0, y, 0.01 * y)
    o_ref[...] = y.astype(o_ref.dtype)


def _round_up(v, m):
    return (v + m - 1) // m * m


def _choose_row_tile(rows, bytes_per_row, *, budget=_VMEM_STREAM_BUDGET,
                     min_steps=8):
    """Largest sublane-aligned row tile that (a) keeps the double-buffered
    input+output blocks under `budget` and (b) still leaves >= min_steps grid
    steps when the problem is big enough (DMA/compute overlap, and >= 4 steps
    per TensorCore once v7x splits the 'parallel' axis across 2 cores)."""
    cands = [r for r in range(_SUBLANE, rows + 1, _SUBLANE) if rows % r == 0]
    if not cands:
        return rows                              # tiny/ragged: one full block
    fitting = [r for r in cands if 2 * r * bytes_per_row <= budget]
    if not fitting:
        fitting = [cands[0]]
    deep = [r for r in fitting if rows // r >= min_steps]
    return max(deep) if deep else min(fitting)


def _toeplitz_weight(weight_hwio, W, pad, dtype):
    """Expand a (K, K, Cin, Cout) HWIO conv weight into the block-Toeplitz
    matrix T of shape (K*Wp*Cin, W*Cout), Wp = W + 2*pad, such that for the
    row-triplet activations A (see conv_block_forward) `A @ T` is the SAME-
    padded stride-1 convolution with a lane-dense (., W*Cout) output."""
    K, _, Cin, Cout = weight_hwio.shape
    Wp = W + 2 * pad
    wi = jnp.arange(Wp)[:, None]                 # padded input column
    wo = jnp.arange(W)[None, :]                  # output column
    kw = wi - wo                                 # W-tap connecting them
    valid = (kw >= 0) & (kw < K)
    gathered = weight_hwio[:, jnp.clip(kw, 0, K - 1)]    # (K, Wp, W, Cin, Cout)
    t = jnp.where(valid[None, :, :, None, None], gathered, 0.0)
    t = jnp.transpose(t, (0, 1, 3, 2, 4))                # (K, Wp, Cin, W, Cout)
    return t.reshape(K * Wp * Cin, W * Cout).astype(dtype)


def conv_block_forward(x_nchw, weight_hwio, gamma, beta, run_mean, run_var,
                       *, eps=1e-3, stride=1, groups=1, dilate=1,
                       stream_dtype=jnp.float32):
    """ConvBlock forward. x_nchw: (N, Cin, H, W). Returns (N, Cout, H, W)."""
    if stride != 1 or groups != 1 or dilate != 1:
        raise NotImplementedError(
            "ConvBlock Pallas kernel implements stride=1, groups=1, dilate=1 "
            "(module defaults) only.")
    N, Cin, H, W = x_nchw.shape
    K, K2, Cin_w, Cout = weight_hwio.shape
    assert K == K2 and Cin_w == Cin, (weight_hwio.shape, x_nchw.shape)
    pad = (K - 1) // 2
    Wp = W + 2 * pad
    depth = K * Cin * Wp            # dense MXU contraction depth (216 here)
    wc = W * Cout                   # lane-dense output width (128 here)
    rows = N * H

    # ---- wrapper glue (one pass over x): NHWC, SAME pad, H row-triplets ----
    # A[n*H + h, kh*Wp*Cin + wi*Cin + ci] = x_pad[n, h + kh, wi, ci]
    # Each input pixel is read K (=3) times, vs K*K (=9) for full im2col.
    x_nhwc = jnp.transpose(x_nchw, (0, 2, 3, 1))
    x_pad = jnp.pad(x_nhwc, ((0, 0), (pad, pad), (pad, pad), (0, 0)))
    taps_h = [x_pad[:, kh:kh + H].reshape(N, H, Wp * Cin) for kh in range(K)]
    a = jnp.concatenate(taps_h, axis=-1).reshape(rows, depth)
    a = a.astype(stream_dtype)

    w_toep = _toeplitz_weight(weight_hwio, W, pad, stream_dtype)

    # Folded BatchNorm affine, pre-tiled to the lane-dense output layout so the
    # kernel epilogue runs on full 128-lane slabs.  Kept out of w_toep to stay
    # bit-identical with the unfolded Conv->BN reference (see header).
    scale = gamma / jnp.sqrt(run_var + eps)
    bias = beta - run_mean * scale
    sb = jnp.stack([jnp.tile(scale, (W,)), jnp.tile(bias, (W,))],
                   axis=0).astype(jnp.float32)            # (2, W*Cout)

    # ---- VMEM-budgeted, pipeline-friendly row tiling ------------------------
    item = jnp.dtype(stream_dtype).itemsize
    bytes_per_row = (_round_up(depth, _LANE) * item                 # A block
                     + _round_up(wc, _LANE) * x_nchw.dtype.itemsize)  # out blk
    r_tile = _choose_row_tile(rows, bytes_per_row)
    grid_len = rows // r_tile

    cost = pl.CostEstimate(
        flops=2 * rows * depth * wc + 4 * rows * wc,
        transcendentals=0,
        bytes_accessed=(a.size * item + w_toep.size * item + sb.size * 4
                        + rows * wc * x_nchw.dtype.itemsize),
    )

    out2d = pl.pallas_call(
        convblock_kernel,
        out_shape=jax.ShapeDtypeStruct((rows, wc), x_nchw.dtype),
        grid_spec=pltpu.PrefetchScalarGridSpec(
            num_scalar_prefetch=0,
            grid=(grid_len,),
            in_specs=[
                pl.BlockSpec((r_tile, depth), lambda i: (i, 0)),
                pl.BlockSpec((depth, wc), lambda i: (0, 0)),   # fetched once
                pl.BlockSpec((2, wc), lambda i: (0, 0)),       # fetched once
            ],
            out_specs=pl.BlockSpec((r_tile, wc), lambda i: (i, 0)),
        ),
        compiler_params=pltpu.CompilerParams(
            dimension_semantics=("parallel",),
            vmem_limit_bytes=_VMEM_LIMIT_BYTES),
        cost_estimate=cost,
    )(a, w_toep, sb)

    # NCHW module interface; a NHWC / lane-dense consumer could take `out2d`
    # directly and skip this transpose (review item 9).
    out_nhwc = out2d.reshape(N, H, W, Cout)
    return jnp.transpose(out_nhwc, (0, 3, 1, 2))


def _reference(x_nchw, weight_hwio, gamma, beta, run_mean, run_var, eps=1e-3):
    x_nhwc = jnp.transpose(x_nchw, (0, 2, 3, 1))
    y = lax.conv_general_dilated(
        x_nhwc.astype(jnp.float32), weight_hwio.astype(jnp.float32),
        window_strides=(1, 1), padding="SAME",
        dimension_numbers=("NHWC", "HWIO", "NHWC"))
    scale = gamma / jnp.sqrt(run_var + eps)
    bias = beta - run_mean * scale
    y = y * scale + bias
    y = jnp.where(y > 0, y, 0.01 * y)
    return jnp.transpose(y, (0, 3, 1, 2))


if __name__ == "__main__":
    # ConvBlock(in_planes=4, out_planes=8, kernel_size=3) with default
    # stride=1, groups=1, dilate=1.
    N, Cin, H, W = 2, 4, 16, 16
    Cout, K = 8, 3

    key = jax.random.PRNGKey(0)
    kx, kw, kg, kb, km, kv = jax.random.split(key, 6)

    x = jax.random.normal(kx, (N, Cin, H, W), dtype=jnp.float32)
    # PyTorch conv weight is (Cout, Cin, K, K); generated here directly in HWIO.
    weight = 0.1 * jax.random.normal(kw, (K, K, Cin, Cout), dtype=jnp.float32)
    gamma = 1.0 + 0.1 * jax.random.normal(kg, (Cout,), dtype=jnp.float32)
    beta = 0.1 * jax.random.normal(kb, (Cout,), dtype=jnp.float32)
    run_mean = 0.1 * jax.random.normal(km, (Cout,), dtype=jnp.float32)
    run_var = 1.0 + 0.1 * jnp.abs(jax.random.normal(kv, (Cout,),
                                                    dtype=jnp.float32))

    fwd = jax.jit(functools.partial(conv_block_forward, eps=1e-3))
    out = jax.block_until_ready(fwd(x, weight, gamma, beta, run_mean, run_var))

    ref = _reference(x, weight, gamma, beta, run_mean, run_var)
    assert out.shape == (N, Cout, H, W), out.shape
    assert jnp.allclose(out, ref, atol=1e-4, rtol=1e-4), (
        float(jnp.max(jnp.abs(out - ref))))

    print("KERNEL_OK")
</pallas_src>

<mosaic_0001>
module attributes {stable_mosaic.version = 11 : i64} {
  func.func @convblock_kernel(%arg0: i32, %arg1: memref<8x216xf32, #tpu.memory_space<vmem>>, %arg2: memref<216x128xf32, #tpu.memory_space<vmem>>, %arg3: memref<2x128xf32, #tpu.memory_space<vmem>>, %arg4: memref<8x128xf32, #tpu.memory_space<vmem>>) attributes {dimension_semantics = [#tpu.dimension_semantics<parallel>], iteration_bounds = array<i64: 4>, scalar_prefetch = 0 : i64, scratch_operands = 0 : i64, tpu.core_type = #tpu.core_type<tc>, window_params = [{transform_indices = @transform_0, window_bounds = array<i64: 8, 216>}, {pipeline_mode = #tpu.pipeline_mode<synchronous>, transform_indices = @transform_1, window_bounds = array<i64: 216, 128>}, {pipeline_mode = #tpu.pipeline_mode<synchronous>, transform_indices = @transform_2, window_bounds = array<i64: 2, 128>}, {transform_indices = @transform_3, window_bounds = array<i64: 8, 128>}]} {
    %c0 = arith.constant 0 : index
    %c0_0 = arith.constant 0 : index
    %0 = vector.load %arg1[%c0, %c0_0] : memref<8x216xf32, #tpu.memory_space<vmem>>, vector<8x216xf32>
    %c0_1 = arith.constant 0 : index
    %c0_2 = arith.constant 0 : index
    %1 = vector.load %arg2[%c0_1, %c0_2] : memref<216x128xf32, #tpu.memory_space<vmem>>, vector<216x128xf32>
    %cst = arith.constant dense<0.000000e+00> : vector<8x128xf32>
    %2 = tpu.matmul %0, %1, %cst {dimension_numbers = #tpu.dot_dimension_numbers<[1], [0], [0], [1], [0, 0, 1, 1], [], []>} : vector<8x216xf32>, vector<216x128xf32>, vector<8x128xf32> -> vector<8x128xf32>
    %c0_3 = arith.constant 0 : index
    %c0_4 = arith.constant 0 : index
    %3 = vector.load %arg3[%c0_3, %c0_4] : memref<2x128xf32, #tpu.memory_space<vmem>>, vector<1x128xf32>
    %4 = vector.broadcast %3 : vector<1x128xf32> to vector<8x128xf32>
    %5 = arith.mulf %2, %4 : vector<8x128xf32>
    %c1 = arith.constant 1 : index
    %c0_5 = arith.constant 0 : index
    %6 = vector.load %arg3[%c1, %c0_5] : memref<2x128xf32, #tpu.memory_space<vmem>>, vector<1x128xf32>
    %7 = vector.broadcast %6 : vector<1x128xf32> to vector<8x128xf32>
    %8 = arith.addf %5, %7 : vector<8x128xf32>
    %cst_6 = arith.constant 0.000000e+00 : f32
    %9 = vector.broadcast %cst_6 : f32 to vector<8x128xf32>
    %10 = arith.cmpf ogt, %8, %9 : vector<8x128xf32>
    %cst_7 = arith.constant 0.00999999977 : f32
    %11 = vector.broadcast %cst_7 : f32 to vector<8x128xf32>
    %12 = arith.mulf %11, %8 : vector<8x128xf32>
    %13 = arith.select %10, %8, %12 : vector<8x128xi1>, vector<8x128xf32>
    %c0_8 = arith.constant 0 : index
    %c0_9 = arith.constant 0 : index
    %14 = vector.load %arg4[%c0_8, %c0_9] : memref<8x128xf32, #tpu.memory_space<vmem>>, vector<8x128xf32>
    tpu.vector_store %arg4[%c0_8, %c0_9], %13 {strides = array<i32>} : memref<8x128xf32, #tpu.memory_space<vmem>>, vector<8x128xf32>,
    return
  }
  func.func @transform_0(%arg0: i32) -> (i32, i32) {
    %c0_i32 = arith.constant 0 : i32
    %c0_i32_0 = arith.constant 0 : i32
    return %arg0, %c0_i32 : i32, i32
  }
  func.func @transform_1(%arg0: i32) -> (i32, i32) {
    %c0_i32 = arith.constant 0 : i32
    %c0_i32_0 = arith.constant 0 : i32
    %c0_i32_1 = arith.constant 0 : i32
    return %c0_i32, %c0_i32_0 : i32, i32
  }
  func.func @transform_2(%arg0: i32) -> (i32, i32) {
    %c0_i32 = arith.constant 0 : i32
    %c0_i32_0 = arith.constant 0 : i32
    %c0_i32_1 = arith.constant 0 : i32
    return %c0_i32, %c0_i32_0 : i32, i32
  }
  func.func @transform_3(%arg0: i32) -> (i32, i32) {
    %c0_i32 = arith.constant 0 : i32
    %c0_i32_0 = arith.constant 0 : i32
    return %arg0, %c0_i32 : i32, i32
  }
}

</mosaic_0001>

<llo_original>
// kernel: tile.17
$region0: #{tile.17}
  #allocation0 [shape = 's32[1]{0}', space=sflag, size = 0x4, scoped, tag = 'scoped memory for tile.17']
  %s0 = inlined_call_operand.vmem [shape: f32[8], index: 0, kind: input, shape index: {}]
  %s1 = inlined_call_operand.vmem [shape: f32[16,8], index: 1, kind: output, shape index: {}]
  // Predicated region
  $region2: #{tile.17} parent=0 // pred_check
    _
  $region3: #{tile.17} parent=0 // pred_check_branch
    %3 = sbr.rel (0) target = $region5
  $region4: #{tile.17} parent=0 // pred_region
    _
  $region5: #{tile.17} parent=0 // pred_fallthru
    _
  %v4 = vld [vmem:[%s0] ss:$0 sm:$0xff]
  %5 = vst [vmem:[%s1] sm:$0xff] %v4
  %s6 = scalar_lea.vmem %s1, 8
  %7 = vst [vmem:[%s6] sm:$0xff] %v4

// kernel: tile.19
$region0: #{tile.19}
  %s0 = inlined_call_operand.vmem [shape: f32[16,8], index: 0, kind: input, shape index: {}]
  %s1 = inlined_call_operand.vmem [shape: f32[1,128], index: 1, kind: output, shape index: {}]
  $region1: #{tile.19} parent=0
    #allocation0 [shape = 'u8[4096]{0}', space=vmem, size = 0x1000, scoped, tag = 'scoped mem for output reshape']
    %v2 = vld [vmem:[%s0] sm:$0x1]
    %vm3 = vcmask 64512
    %4 = vst.msk [vmem:[#allocation0] sm:$0x1] %vm3, %v2
    %s5 = scalar_lea.vmem %s0, 15
    %v6 = vld [vmem:[%s5] sm:$0x1]
    %7 = vrot.lane.b32.xlu0 %v6, 120
    %v8 = vpop.permute.xlu0 %7
    %vm9 = vcmask 1048512
    %10 = vst.msk [vmem:[#allocation0] sm:$0x1] %vm9, %v8
    %s11 = scalar_lea.vmem %s0, 14
    %v12 = vld [vmem:[%s11] sm:$0x1]
    %13 = vrot.lane.b32.xlu0 %v12, 112
    %v14 = vpop.permute.xlu0 %13
    %vm15 = vcmask 982912
    %16 = vst.msk [vmem:[#allocation0] sm:$0x1] %vm15, %v14
    %s17 = scalar_lea.vmem %s0, 13
    %v18 = vld [vmem:[%s17] sm:$0x1]
    %19 = vrot.lane.b32.xlu0 %v18, 104
    %v20 = vpop.permute.xlu0 %19
    %vm21 = vcmask 917312
    %22 = vst.msk [vmem:[#allocation0] sm:$0x1] %vm21, %v20
    %s23 = scalar_lea.vmem %s0, 12
    %v24 = vld [vmem:[%s23] sm:$0x1]
    %25 = vrot.lane.b32.xlu0 %v24, 96
    %v26 = vpop.permute.xlu0 %25
    %vm27 = vcmask 851712
    %28 = vst.msk [vmem:[#allocation0] sm:$0x1] %vm27, %v26
    %s29 = scalar_lea.vmem %s0, 11
    %v30 = vld [vmem:[%s29] sm:$0x1]
    %31 = vrot.lane.b32.xlu0 %v30, 88
    %v32 = vpop.permute.xlu0 %31
    %vm33 = vcmask 786112
    %34 = vst.msk [vmem:[#allocation0] sm:$0x1] %vm33, %v32
    %s35 = scalar_lea.vmem %s0, 10
    %v36 = vld [vmem:[%s35] sm:$0x1]
    %37 = vrot.lane.b32.xlu0 %v36, 80
    %v38 = vpop.permute.xlu0 %37
    %vm39 = vcmask 720512
    %40 = vst.msk [vmem:[#allocation0] sm:$0x1] %vm39, %v38
    %s41 = scalar_lea.vmem %s0, 9
    %v42 = vld [vmem:[%s41] sm:$0x1]
    %43 = vrot.lane.b32.xlu0 %v42, 72
    %v44 = vpop.permute.xlu0 %43
    %vm45 = vcmask 654912
    %46 = vst.msk [vmem:[#allocation0] sm:$0x1] %vm45, %v44
    %s47 = scalar_lea.vmem %s0, 8
    %v48 = vld [vmem:[%s47] sm:$0x1]
    %49 = vrot.lane.b32.xlu0 %v48, 64
    %v50 = vpop.permute.xlu0 %49
    %vm51 = vcmask 589312
    %52 = vst.msk [vmem:[#allocation0] sm:$0x1] %vm51, %v50
    %s53 = scalar_lea.vmem %s0, 7
    %v54 = vld [vmem:[%s53] sm:$0x1]
    %55 = vrot.lane.b32.xlu0 %v54, 56
    %v56 = vpop.permute.xlu0 %55
    %vm57 = vcmask 523712
    %58 = vst.msk [vmem:[#allocation0] sm:$0x1] %vm57, %v56
    %s59 = scalar_lea.vmem %s0, 6
    %v60 = vld [vmem:[%s59] sm:$0x1]
    %61 = vrot.lane.b32.xlu0 %v60, 48
    %v62 = vpop.permute.xlu0 %61
    %vm63 = vcmask 458112
    %64 = vst.msk [vmem:[#allocation0] sm:$0x1] %vm63, %v62
    %s65 = scalar_lea.vmem %s0, 5
    %v66 = vld [vmem:[%s65] sm:$0x1]
    %67 = vrot.lane.b32.xlu0 %v66, 40
    %v68 = vpop.permute.xlu0 %67
    %vm69 = vcmask 392512
    %70 = vst.msk [vmem:[#allocation0] sm:$0x1] %vm69, %v68
    %s71 = scalar_lea.vmem %s0, 4
    %v72 = vld [vmem:[%s71] sm:$0x1]
    %73 = vrot.lane.b32.xlu0 %v72, 32
    %v74 = vpop.permute.xlu0 %73
    %vm75 = vcmask 326912
    %76 = vst.msk [vmem:[#allocation0] sm:$0x1] %vm75, %v74
    %s77 = scalar_lea.vmem %s0, 3
    %v78 = vld [vmem:[%s77] sm:$0x1]
    %79 = vrot.lane.b32.xlu0 %v78, 24
    %v80 = vpop.permute.xlu0 %79
    %vm81 = vcmask 261312
    %82 = vst.msk [vmem:[#allocation0] sm:$0x1] %vm81, %v80
    %s83 = scalar_lea.vmem %s0, 2
    %v84 = vld [vmem:[%s83] sm:$0x1]
    %85 = vrot.lane.b32.xlu0 %v84, 16
    %v86 = vpop.permute.xlu0 %85
    %vm87 = vcmask 195712
    %88 = vst.msk [vmem:[#allocation0] sm:$0x1] %vm87, %v86
    %s89 = scalar_lea.vmem %s0, 1
    %v90 = vld [vmem:[%s89] sm:$0x1]
    %91 = vrot.lane.b32.xlu0 %v90, 8
    %v92 = vpop.permute.xlu0 %91
    %vm93 = vcmask 130112
    %94 = vst.msk [vmem:[#allocation0] sm:$0x1] %vm93, %v92
    %s96 = sshllo.u32 0, 1
    %v98 = vld [vmem:[#allocation0] sm:%s96]
    %s99 = sshllo.u32 0, 1
    %100 = vst [vmem:[%s1] sm:%s99] %v98

// kernel: conv_block_forward.1
$region0: #{conv_block_forward.1}
  #allocation0 [shape = 'u32[]', space=smem, size = 0x4, offset = 0x4, fixed_abs, tag = 'smem constant byte address 0x4 - core index']
  #allocation1 [shape = 'u32[144,128]{1,0:T(1,128)}', space=vmem, size = 0x12000, scoped, tag = 'internal scratch']
  %s0 = inlined_call_operand.vmem [shape: f32[32,216], index: 0, kind: input, shape index: {}]
  %s1 = inlined_call_operand.vmem [shape: f32[216,128], index: 1, kind: input, shape index: {}]
  %s2 = inlined_call_operand.vmem [shape: f32[2,128], index: 2, kind: input, shape index: {}]
  %s3 = inlined_call_operand.vmem [shape: f32[32,128], index: 3, kind: output, shape index: {}]
  %s4 = sld [smem:[#allocation0]]
  $region45: #{conv_block_forward.1} parent=0
    _
  %s6 = ssub.s32 1, %s4
  %s7 = scalar_select 0, %s6, %s4
  loop: start=0, step=1, limit=6
  $region2: #{conv_block_forward.1} parent=0 // loop_pre_header
    _
  $region3: #{conv_block_forward.1} parent=0 // loop_header
    %s9 = sphi 0, %s13
    %p10 = scmp.ge.s32.totalorder %s9, 6
    %s19 = sphi 0, %s21
    %s22 = sphi 0, %s19
    %s23 = sphi 0, %s22
    %s39 = sphi 0, %s23
    %s43 = sphi 0, %s43
    %s45 = sphi 0, %s43
    %s46 = sphi 0, %s45
    %s60 = sphi 0, %s46
    %s64 = sphi 0, %s64
    %s66 = sphi 0, %s64
    %s67 = sphi 0, %s66
    %s81 = sphi 0, %s67
    %s87 = sphi 0, %s89
    %s90 = sphi 0, %s87
    %s91 = sphi 0, %s90
    %s107 = sphi 0, %s91
  $region4: #{conv_block_forward.1} parent=0 // loop_header_branch
    %12 = sbr.rel (%p10) target = $region8
  $region5: #{conv_block_forward.1} parent=0 // loop_body
    %s14 = ssub.s32 %s9, 1
    %s15 = ssub.s32 %s9, 2
    %s16 = sadd.s32 %s9, 1
    %s17 = ssub.s32 %s9, %s16
    %p18 = scmp.eq.s32.totalorder %s17, 0
    %s20 = sadd.s32 %s19, 1
    %s21 = scalar_select %p18, %s19, %s20
    %p24 = pneg %p18
    %p25 = scmp.eq.s32.totalorder %s9, 3
    %p26 = por %p24, %p25
    %p27 = scmp.ne.s32.totalorder %s19, %s22
    %p28 = scmp.eq.s32.totalorder %s9, 0
    %p29 = por %p27, %p28
    %p30 = scmp.ne.s32.totalorder %s19, %s22
    %p31 = scmp.eq.s32.totalorder %s14, 3
    %p32 = por %p30, %p31
    %p33 = scmp.ne.s32.totalorder %s22, %s23
    %p34 = scmp.eq.s32.totalorder %s14, 0
    %p35 = por %p33, %p34
    %p36 = scmp.ne.s32.totalorder %s22, %s23
    %p37 = scmp.eq.s32.totalorder %s15, 3
    %p38 = por %p36, %p37
    %p40 = scmp.ne.s32.totalorder %s23, %s39
    %p41 = scmp.eq.s32.totalorder %s15, 0
    %p42 = por %p40, %p41
    %s44 = sadd.s32 %s43, 1
    %p47 = scmp.eq.s32.totalorder %s9, 3
    %p48 = scmp.ne.s32.totalorder %s43, %s45
    %p49 = scmp.eq.s32.totalorder %s9, 0
    %p50 = por %p48, %p49
    %p51 = scmp.ne.s32.totalorder %s43, %s45
    %p52 = scmp.eq.s32.totalorder %s14, 3
    %p53 = por %p51, %p52
    %p54 = scmp.ne.s32.totalorder %s45, %s46
    %p55 = scmp.eq.s32.totalorder %s14, 0
    %p56 = por %p54, %p55
    %p57 = scmp.ne.s32.totalorder %s45, %s46
    %p58 = scmp.eq.s32.totalorder %s15, 3
    %p59 = por %p57, %p58
    %p61 = scmp.ne.s32.totalorder %s46, %s60
    %p62 = scmp.eq.s32.totalorder %s15, 0
    %p63 = por %p61, %p62
    %s65 = sadd.s32 %s64, 1
    %p68 = scmp.eq.s32.totalorder %s9, 3
    %p69 = scmp.ne.s32.totalorder %s64, %s66
    %p70 = scmp.eq.s32.totalorder %s9, 0
    %p71 = por %p69, %p70
    %p72 = scmp.ne.s32.totalorder %s64, %s66
    %p73 = scmp.eq.s32.totalorder %s14, 3
    %p74 = por %p72, %p73
    %p75 = scmp.ne.s32.totalorder %s66, %s67
    %p76 = scmp.eq.s32.totalorder %s14, 0
    %p77 = por %p75, %p76
    %p78 = scmp.ne.s32.totalorder %s66, %s67
    %p79 = scmp.eq.s32.totalorder %s15, 3
    %p80 = por %p78, %p79
    %p82 = scmp.ne.s32.totalorder %s67, %s81
    %p83 = scmp.eq.s32.totalorder %s15, 0
    %p84 = por %p82, %p83
    %s85 = ssub.s32 %s9, %s16
    %p86 = scmp.eq.s32.totalorder %s85, 0
    %s88 = sadd.s32 %s87, 1
    %s89 = scalar_select %p86, %s87, %s88
    %p92 = pneg %p86
    %p93 = scmp.eq.s32.totalorder %s9, 3
    %p94 = por %p92, %p93
    %p95 = scmp.ne.s32.totalorder %s87, %s90
    %p96 = scmp.eq.s32.totalorder %s9, 0
    %p97 = por %p95, %p96
    %p98 = scmp.ne.s32.totalorder %s87, %s90
    %p99 = scmp.eq.s32.totalorder %s14, 3
    %p100 = por %p98, %p99
    %p101 = scmp.ne.s32.totalorder %s90, %s91
    %p102 = scmp.eq.s32.totalorder %s14, 0
    %p103 = por %p101, %p102
    %p104 = scmp.ne.s32.totalorder %s90, %s91
    %p105 = scmp.eq.s32.totalorder %s15, 3
    %p106 = por %p104, %p105
    %p108 = scmp.ne.s32.totalorder %s91, %s107
    %p109 = scmp.eq.s32.totalorder %s15, 0
    %p110 = por %p108, %p109
    %p111 = scmp.le.s32.totalorder 1, %s9
    %p112 = scmp.lt.s32.totalorder %s9, 5
    %p113 = pnand %p111, %p112
    %p114 = pneg %p113
    // Predicated region
    $region9: #{conv_block_forward.1} parent=5 // pred_check
      _
    $region10: #{conv_block_forward.1} parent=5 // pred_check_branch
      %116 = sbr.rel (%p113) target = $region12
    $region11: #{conv_block_forward.1} parent=5 // pred_region
      %s117 = ssub.s32 %s9, 1
      // Predicated region
      $region13: #{conv_block_forward.1} parent=11 // pred_check
        %p118 = pneg %p56
      $region14: #{conv_block_forward.1} parent=11 // pred_check_branch
        %120 = sbr.rel (%p118) target = $region16
      $region15: #{conv_block_forward.1} parent=11 // pred_region
        _
      $region16: #{conv_block_forward.1} parent=11 // pred_fallthru
        _
      // Predicated region
      $region17: #{conv_block_forward.1} parent=11 // pred_check
        %p121 = pneg %p77
      $region18: #{conv_block_forward.1} parent=11 // pred_check_branch
        %123 = sbr.rel (%p121) target = $region20
      $region19: #{conv_block_forward.1} parent=11 // pred_region
        _
      $region20: #{conv_block_forward.1} parent=11 // pred_fallthru
        _
    $region12: #{conv_block_forward.1} parent=5 // pred_fallthru
      _
    %p124 = scmp.lt.s32.totalorder %s9, 4
    // Predicated region
    $region21: #{conv_block_forward.1} parent=5 // pred_check
      %p125 = pneg %p124
    $region22: #{conv_block_forward.1} parent=5 // pred_check_branch
      %127 = sbr.rel (%p125) target = $region24
    $region23: #{conv_block_forward.1} parent=5 // pred_region
      // Predicated region
      $region25: #{conv_block_forward.1} parent=23 // pred_check
        %p128 = pneg %p29
      $region26: #{conv_block_forward.1} parent=23 // pred_check_branch
        %130 = sbr.rel (%p128) target = $region28
      $region27: #{conv_block_forward.1} parent=23 // pred_region
        %p131 = scmp.lt.s32.totalorder %s9, 3
        %s132 = scalar_select %p131, %s9, 3
        %s133 = smul.addr %s132, 2
        %s134 = smul.addr %s133, 8
        %s135 = scalar_lea.vmem %s0, %s134
      $region28: #{conv_block_forward.1} parent=23 // pred_fallthru
        _
    $region24: #{conv_block_forward.1} parent=5 // pred_fallthru
      _
    %p136 = scmp.le.s32.totalorder 1, %s9
    %p137 = scmp.lt.s32.totalorder %s9, 5
    %p138 = pnand %p136, %p137
    %p139 = pneg %p138
    // Predicated region
    $region29: #{conv_block_forward.1} parent=5 // pred_check
      _
    $region30: #{conv_block_forward.1} parent=5 // pred_check_branch
      %141 = sbr.rel (%p138) target = $region32
    $region31: #{conv_block_forward.1} parent=5 // pred_region
      %s142 = ssub.s32 %s9, 1
      %p143 = scmp.lt.s32.totalorder %s14, 3
      %s144 = scalar_select %p143, %s14, 3
      %s145 = smul.addr %s144, 2
      %s146 = smul.addr %s145, 8
      %s147 = scalar_lea.vmem %s0, %s146
      %p148 = pneg %p35
      %p149 = pneg %p32
      %p150 = pneg %p56
      %p151 = pneg %p53
      %p152 = pneg %p77
      %p153 = pneg %p74
      %p154 = pneg %p103
      %p155 = pneg %p100
      %p156 = scmp.lt.s32.totalorder %s14, 3
      %s157 = scalar_select %p156, %s14, 3
      %s158 = smul.addr %s157, 8
      %s159 = scalar_lea.vmem %s3, %s158
      %p160 = scmp.lt.s32.totalorder %s14, 3
      %s161 = scalar_select %p160, %s14, 3
      %s162 = smul.addr %s161, 2
      %s163 = smul.addr %s162, 8
      %s164 = scalar_lea.vmem %s0, %s163
      %p165 = scmp.lt.s32.totalorder %s14, 3
      %s166 = scalar_select %p165, %s14, 3
      %s167 = smul.addr %s166, 8
      %s168 = scalar_lea.vmem %s3, %s167
      %v169 = vld [vmem:[%s164] sm:$0xff]
      %v170 = vld [vmem:[%s164 + $0x8] sm:$0xff]
      %v171 = vld [vmem:[%s1] sm:$0xff]
      %v172 = vld [vmem:[%s1 + $0x8] sm:$0xff]
      %v173 = vld [vmem:[%s1 + $0x10] sm:$0xff]
      %v174 = vld [vmem:[%s1 + $0x18] sm:$0xff]
      %v175 = vld [vmem:[%s1 + $0x20] sm:$0xff]
      %v176 = vld [vmem:[%s1 + $0x28] sm:$0xff]
      %v177 = vld [vmem:[%s1 + $0x30] sm:$0xff]
      %v178 = vld [vmem:[%s1 + $0x38] sm:$0xff]
      %v179 = vld [vmem:[%s1 + $0x40] sm:$0xff]
      %v180 = vld [vmem:[%s1 + $0x48] sm:$0xff]
      %v181 = vld [vmem:[%s1 + $0x50] sm:$0xff]
      %v182 = vld [vmem:[%s1 + $0x58] sm:$0xff]
      %v183 = vld [vmem:[%s1 + $0x60] sm:$0xff]
      %v184 = vld [vmem:[%s1 + $0x68] sm:$0xff]
      %v185 = vld [vmem:[%s1 + $0x70] sm:$0xff]
      %v186 = vld [vmem:[%s1 + $0x78] sm:$0xff]
      %v187 = vld [vmem:[%s1 + $0x80] sm:$0xff]
      %v188 = vld [vmem:[%s1 + $0x88] sm:$0xff]
      %v189 = vld [vmem:[%s1 + $0x90] sm:$0xff]
      %v190 = vld [vmem:[%s1 + $0x98] sm:$0xff]
      %v191 = vld [vmem:[%s1 + $0xa0] sm:$0xff]
      %v192 = vld [vmem:[%s1 + $0xa8] sm:$0xff]
      %v193 = vld [vmem:[%s1 + $0xb0] sm:$0xff]
      %v194 = vld [vmem:[%s1 + $0xb8] sm:$0xff]
      %v195 = vld [vmem:[%s1 + $0xc0] sm:$0xff]
      %v196 = vld [vmem:[%s1 + $0xc8] sm:$0xff]
      %v197 = vld [vmem:[%s1 + $0xd0] sm:$0xff]
      %vm198 = vcmask 719872
      %v200 = vsel %vm198, %v170, 0
      %202 = vmatprep.subr.mxu0 0.0
      %203 = vmatpush1.msra.mxu0 %v171
      %204 = vmatprep.subr.mxu0 0.0
      %205 = vmatpush1.msra.mxu0 %v172
      %206 = vmatprep.subr.mxu0 0.0
      %207 = vmatpush1.msra.mxu0 %v173
      %208 = vmatprep.subr.mxu0 0.0
      %209 = vmatpush1.msra.mxu0 %v174
      %210 = vmatprep.subr.mxu0 0.0
      %211 = vmatpush1.msra.mxu0 %v175
      %212 = vmatprep.subr.mxu0 0.0
      %213 = vmatpush1.msra.mxu0 %v176
      %214 = vmatprep.subr.mxu0 0.0
      %215 = vmatpush1.msra.mxu0 %v177
      %216 = vmatprep.subr.mxu0 0.0
      %217 = vmatpush1.msra.mxu0 %v178
      %218 = vmatprep.subr.mxu0 0.0
      %219 = vmatpush1.msra.mxu0 %v179
      %220 = vmatprep.subr.mxu0 0.0
      %221 = vmatpush1.msra.mxu0 %v180
      %222 = vmatprep.subr.mxu0 0.0
      %223 = vmatpush1.msra.mxu0 %v181
      %224 = vmatprep.subr.mxu0 0.0
      %225 = vmatpush1.msra.mxu0 %v182
      %226 = vmatprep.subr.mxu0 0.0
      %227 = vmatpush1.msra.mxu0 %v183
      %228 = vmatprep.subr.mxu0 0.0
      %229 = vmatpush1.msra.mxu0 %v184
      %230 = vmatprep.subr.mxu0 0.0
      %231 = vmatpush1.msra.mxu0 %v185
      %232 = vmatprep.subr.mxu0 0.0
      %233 = vmatpush1.msra.mxu0 %v186
      %234 = vmatprep.subr.mxu0 0.0
      %235 = vmatpush1.msra.mxu0 %v187
      %236 = vmatprep.subr.mxu0 0.0
      %237 = vmatpush1.msra.mxu0 %v188
      %238 = vmatprep.subr.mxu0 0.0
      %239 = vmatpush1.msra.mxu0 %v189
      %240 = vmatprep.subr.mxu0 0.0
      %241 = vmatpush1.msra.mxu0 %v190
      %242 = vmatprep.subr.mxu0 0.0
      %243 = vmatpush1.msra.mxu0 %v191
      %244 = vmatprep.subr.mxu0 0.0
      %245 = vmatpush1.msra.mxu0 %v192
      %246 = vmatprep.subr.mxu0 0.0
      %247 = vmatpush1.msra.mxu0 %v193
      %248 = vmatprep.subr.mxu0 0.0
      %249 = vmatpush1.msra.mxu0 %v194
      %250 = vmatprep.subr.mxu0 0.0
      %251 = vmatpush1.msra.mxu0 %v195
      %252 = vmatprep.subr.mxu0 0.0
      %253 = vmatpush1.msra.mxu0 %v196
      %254 = vmatprep.subr.mxu0 0.0
      %255 = vmatpush1.msra.mxu0 %v197
      %256 = vmatprep.subr.mxu0 0.0
      %257 = vmatpush1.msra.mxu0 0.0
      %258 = vmatprep.subr.mxu0 0.0
      %259 = vmatpush1.msra.mxu0 0.0
      %260 = vmatprep.subr.mxu0 0.0
      %261 = vmatpush1.msra.mxu0 0.0
      %262 = vmatprep.subr.mxu0 0.0
      %263 = vmatpush1.msra.mxu0 0.0
      %264 = vmatprep.subr.mxu0 0.0
      %265 = vmatpush1.msra.mxu0 0.0
      %266 = vmatprep.mubr.f32.mxu0 %v200
      %267 = vmatmul.mubr.f32.gmra.mrb[0].mxu0 %v169
      %v268 = vpop.f32.mrb[0].mxu0
      %v269 = vadd.f32 0.0, %v268
      %v270 = vpop.f32.mrb[0].mxu0
      %271 = vdwg.mxu0
      %v272 = vld [vmem:[%s2] sm:$0x1]
      %v273 = vlaneseq
      %v274 = vshrl.u32 %v273, 7
      %v275 = vsub.s32 0, %v274
      %v276 = vrot.slane %v272, %v275
      %v277 = vmul.f32 %v269, %v276
      %v278 = vld [vmem:[%s2 + $0x1] sm:$0x1]
      %v279 = vlaneseq
      %v280 = vshrl.u32 %v279, 7
      %v281 = vsub.s32 0, %v280
      %v282 = vrot.slane %v278, %v281
      %v283 = vadd.f32 %v277, %v282
      %vm284 = vcmp.gt.f32.partialorder %v283, 0.0
      %v285 = vmul.f32 %v283, 0.01
      %v286 = vsel %vm284, %v283, %v285
      %287 = vst [vmem:[%s168] sm:$0xff] %v286
      %p288 = scmp.lt.s32.totalorder %s14, 3
      %s289 = scalar_select %p288, %s14, 3
      %s290 = smul.addr %s289, 8
      %s291 = scalar_lea.vmem %s3, %s290
      // Predicated region
      $region33: #{conv_block_forward.1} parent=31 // pred_check
        %p292 = pneg %p100
      $region34: #{conv_block_forward.1} parent=31 // pred_check_branch
        %294 = sbr.rel (%p292) target = $region36
      $region35: #{conv_block_forward.1} parent=31 // pred_region
        _
      $region36: #{conv_block_forward.1} parent=31 // pred_fallthru
        _
    $region32: #{conv_block_forward.1} parent=5 // pred_fallthru
      _
    %p295 = scmp.le.s32.totalorder 2, %s9
    // Predicated region
    $region37: #{conv_block_forward.1} parent=5 // pred_check
      %p296 = pneg %p295
    $region38: #{conv_block_forward.1} parent=5 // pred_check_branch
      %298 = sbr.rel (%p296) target = $region40
    $region39: #{conv_block_forward.1} parent=5 // pred_region
      %s299 = ssub.s32 %s9, 2
      // Predicated region
      $region41: #{conv_block_forward.1} parent=39 // pred_check
        %p300 = pneg %p106
      $region42: #{conv_block_forward.1} parent=39 // pred_check_branch
        %302 = sbr.rel (%p300) target = $region44
      $region43: #{conv_block_forward.1} parent=39 // pred_region
        %p303 = scmp.lt.s32.totalorder %s15, 3
        %s304 = scalar_select %p303, %s15, 3
        %s305 = smul.addr %s304, 8
        %s306 = scalar_lea.vmem %s3, %s305
      $region44: #{conv_block_forward.1} parent=39 // pred_fallthru
        _
    $region40: #{conv_block_forward.1} parent=5 // pred_fallthru
      _
  $region6: #{conv_block_forward.1} parent=0 // loop_footer
    %s13 = sadd.s32 1, %s9
  $region7: #{conv_block_forward.1} parent=0 // loop_footer_branch
    %8 = sbr.rel target = $region3
  $region8: #{conv_block_forward.1} parent=0 // loop_exit
    _

</llo_original>
